<compile_context>
chip_gen: v7x
topology: tpu7x:2x2x1
jax: 0.10.0
libtpu: 0.0.40
codegen_flags: <defaults>
</compile_context>

<pallas_src>
import functools

import numpy as np
import jax
import jax.numpy as jnp
from jax.experimental import pallas as pl
from jax.experimental.pallas import tpu as pltpu

# Constants from the PyTorch module (non-trainable buffers, float32).
SCALER_SCALE = [
    5.009924761018587, 1.0018188597242355, 0.010292174692060528,
    0.16288265085698453, 0.04559109321673852, 0.1682473240927026,
    0.15967887456557378, 0.0015586544595969428, 0.010722259319073196,
    0.6364301120505811, 0.6360764093711175, 0.6353961809445742,
    0.31929392780031585, 0.6707174031592557, 0.6534433964656056,
    0.002462418781983633, 12.514212104101508,
]
SCALER_MIN = [
    0.49977842782898685, 0.4994941706919238, -0.020606080641338675,
    0.5002919753099604, -0.009400341457049127, 0.49997065712986616,
    0.4996155459607123, -0.033067499716928135, -0.05139944510782373,
    -0.0005472203187390946, -8.2416517989992e-05, -3.700403245065246e-05,
    -0.0003170755908927612, -1.2027876307280915e-06, -7.862871723487552e-05,
    -1.7337162673375185e-06, -11.51308429548884,
]
NUM_FEATURES = 17
LANE_W = NUM_FEATURES * 128      # 2176: lane-dense row width (mult. of 128 & 17)
MAX_BLOCK_ROWS = 1024            # 8.5 MiB f32 block; good for v7x/v6e, fine on v5e

# Host-side constants built once at import (hoisted out of the wrapper).
_SCALE_VEC_NP = np.asarray(SCALER_SCALE, np.float32)
_MIN_VEC_NP = np.asarray(SCALER_MIN, np.float32)
_SCALE_ROW_NP = np.tile(_SCALE_VEC_NP, 128).reshape(1, LANE_W)
_MIN_ROW_NP = np.tile(_MIN_VEC_NP, 128).reshape(1, LANE_W)


@functools.lru_cache(maxsize=None)
def _device_consts():
    """Device-resident constants, created once (constant-fold under jit)."""
    return (jnp.asarray(_SCALE_ROW_NP), jnp.asarray(_MIN_ROW_NP),
            jnp.asarray(_SCALE_VEC_NP), jnp.asarray(_MIN_VEC_NP))


def _feature_scaler_kernel(x_ref, scale_ref, min_ref, o_ref):
    # Memory-bound VPU FMA on a lane-dense (block_rows, 2176) tile.
    # scale/min are (1, 2176) f32 rows broadcast over the sublane axis.
    x = x_ref[...].astype(jnp.float32)
    o_ref[...] = (x * scale_ref[...] + min_ref[...]).astype(o_ref.dtype)


def _pick_block_rows(n_rows: int) -> int:
    """Block rows: cap at MAX_BLOCK_ROWS, but keep ~4 grid steps for medium
    inputs (pipelining + v7x dual-TC); full-extent block only for tiny inputs."""
    if n_rows >= 4 * MAX_BLOCK_ROWS:
        return MAX_BLOCK_ROWS
    target = pl.cdiv(n_rows, 4)
    rounded = ((target + 7) // 8) * 8          # sublane-aligned
    return min(n_rows, max(8, min(MAX_BLOCK_ROWS, rounded)))


def _scaler_2d(x2d: jax.Array, out_dtype) -> jax.Array:
    """Run the Pallas kernel over a (n_rows, 2176) lane-dense view."""
    n_rows = x2d.shape[0]
    block_rows = _pick_block_rows(n_rows)
    grid = (pl.cdiv(n_rows, block_rows),)
    scale_row, min_row, _, _ = _device_consts()

    # VMEM limit = actual double-buffered in+out footprint + slack (constants
    # are tiny).  Never claims all of v7x's 64 MiB physical VMEM.
    itemsz = np.dtype(x2d.dtype).itemsize + np.dtype(out_dtype).itemsize
    vmem_limit = int(2 * block_rows * LANE_W * itemsz + (8 << 20))

    return pl.pallas_call(
        _feature_scaler_kernel,
        out_shape=jax.ShapeDtypeStruct((n_rows, LANE_W), out_dtype),
        grid=grid,
        in_specs=[
            pl.BlockSpec((block_rows, LANE_W), lambda i: (i, 0)),
            pl.BlockSpec((1, LANE_W), lambda i: (0, 0)),   # resident across grid
            pl.BlockSpec((1, LANE_W), lambda i: (0, 0)),   # resident across grid
        ],
        out_specs=pl.BlockSpec((block_rows, LANE_W), lambda i: (i, 0)),
        compiler_params=pltpu.CompilerParams(
            dimension_semantics=("parallel",),   # v7x: shard rows over both TCs
            vmem_limit_bytes=vmem_limit,
        ),
    )(x2d, scale_row, min_row)


def feature_scaler(x: jax.Array) -> jax.Array:
    """out = x * scaler_scale + scaler_min along the trailing feature axis (F=17)."""
    assert x.shape[-1] == NUM_FEATURES, "last dim must be 17 features"
    orig_shape = x.shape
    # Torch promotion: float32 buffers promote bf16/fp16/int inputs to float32.
    out_dtype = jnp.promote_types(x.dtype, jnp.float32)

    total = x.size
    x_flat = x.reshape(-1)                     # free (contiguous)
    n_rows = total // LANE_W
    rem = total % LANE_W                       # always a multiple of 17
    _, _, scale_vec, min_vec = _device_consts()

    if n_rows == 0:
        # Truly tiny input: a single fused XLA elementwise op is already at
        # the HBM roofline; a pallas_call would only add overhead.
        return (x.astype(jnp.float32) * scale_vec + min_vec).astype(out_dtype)

    if rem == 0:
        # Aligned fast path: reshapes are free -> zero extra HBM traffic.
        out2d = _scaler_2d(x_flat.reshape(n_rows, LANE_W), out_dtype)
        return out2d.reshape(orig_shape)

    # Misaligned total: kernel on the aligned prefix, tiny jnp epilogue on the
    # <2176-element tail (no full-array jnp.pad / output trim).
    main = n_rows * LANE_W
    out_main = _scaler_2d(x_flat[:main].reshape(n_rows, LANE_W), out_dtype)
    tail = x_flat[main:].reshape(-1, NUM_FEATURES).astype(jnp.float32)
    out_tail = (tail * scale_vec + min_vec).astype(out_dtype).reshape(-1)
    # TODO(synk): the prefix slice / concatenate may still copy; the real fix
    # is fusing this affine transform into the adjacent producer/consumer op.
    return jnp.concatenate([out_main.reshape(-1), out_tail]).reshape(orig_shape)


def _reference(x: jax.Array) -> jax.Array:
    out_dtype = jnp.promote_types(x.dtype, jnp.float32)
    scale = jnp.asarray(_SCALE_VEC_NP)
    smin = jnp.asarray(_MIN_VEC_NP)
    return (x.astype(jnp.float32) * scale + smin).astype(out_dtype)


if __name__ == "__main__":
    key = jax.random.PRNGKey(0)
    k1, k2, k3 = jax.random.split(key, 3)

    # 1) Aligned input: 4096*17 elems -> 32 lane-dense rows, block_rows=8,
    #    grid=(4,) -> exercises the multi-step, double-buffered pipeline.
    x1 = jax.random.normal(k1, (4096, NUM_FEATURES), dtype=jnp.float32)
    y1 = feature_scaler(x1)
    jax.block_until_ready(y1)
    assert y1.shape == x1.shape and y1.dtype == jnp.float32
    assert jnp.allclose(y1, _reference(x1), rtol=1e-6, atol=1e-5)

    # 2) Misaligned multi-dim batch: kernel on aligned prefix + jnp tail epilogue.
    x2 = jax.random.normal(k2, (2, 300, NUM_FEATURES), dtype=jnp.float32)
    y2 = feature_scaler(x2)
    jax.block_until_ready(y2)
    assert y2.shape == x2.shape
    assert jnp.allclose(y2, _reference(x2), rtol=1e-6, atol=1e-5)

    # 3) bf16 input promotes to float32 output (matches torch buffer promotion).
    x3 = jax.random.normal(k3, (256, NUM_FEATURES), dtype=jnp.bfloat16)
    y3 = feature_scaler(x3)
    jax.block_until_ready(y3)
    assert y3.shape == x3.shape and y3.dtype == jnp.float32
    assert jnp.allclose(y3, _reference(x3), rtol=1e-6, atol=1e-5)

    print("KERNEL_OK")
</pallas_src>

<mosaic_0001>
module attributes {stable_mosaic.version = 11 : i64} {
  func.func @_feature_scaler_kernel(%arg0: i32, %arg1: memref<8x2176xf32, #tpu.memory_space<vmem>>, %arg2: memref<1x2176xf32, #tpu.memory_space<vmem>>, %arg3: memref<1x2176xf32, #tpu.memory_space<vmem>>, %arg4: memref<8x2176xf32, #tpu.memory_space<vmem>>) attributes {dimension_semantics = [#tpu.dimension_semantics<parallel>], iteration_bounds = array<i64: 4>, scalar_prefetch = 0 : i64, scratch_operands = 0 : i64, tpu.core_type = #tpu.core_type<tc>, window_params = [{transform_indices = @transform_0, window_bounds = array<i64: 8, 2176>}, {pipeline_mode = #tpu.pipeline_mode<synchronous>, transform_indices = @transform_1, window_bounds = array<i64: 1, 2176>}, {pipeline_mode = #tpu.pipeline_mode<synchronous>, transform_indices = @transform_2, window_bounds = array<i64: 1, 2176>}, {transform_indices = @transform_3, window_bounds = array<i64: 8, 2176>}]} {
    %c0 = arith.constant 0 : index
    %c0_0 = arith.constant 0 : index
    %0 = vector.load %arg1[%c0, %c0_0] : memref<8x2176xf32, #tpu.memory_space<vmem>>, vector<8x2176xf32>
    %c0_1 = arith.constant 0 : index
    %c0_2 = arith.constant 0 : index
    %1 = vector.load %arg2[%c0_1, %c0_2] : memref<1x2176xf32, #tpu.memory_space<vmem>>, vector<1x2176xf32>
    %2 = vector.broadcast %1 : vector<1x2176xf32> to vector<8x2176xf32>
    %3 = arith.mulf %0, %2 : vector<8x2176xf32>
    %c0_3 = arith.constant 0 : index
    %c0_4 = arith.constant 0 : index
    %4 = vector.load %arg3[%c0_3, %c0_4] : memref<1x2176xf32, #tpu.memory_space<vmem>>, vector<1x2176xf32>
    %5 = vector.broadcast %4 : vector<1x2176xf32> to vector<8x2176xf32>
    %6 = arith.addf %3, %5 : vector<8x2176xf32>
    %c0_5 = arith.constant 0 : index
    %c0_6 = arith.constant 0 : index
    %7 = vector.load %arg4[%c0_5, %c0_6] : memref<8x2176xf32, #tpu.memory_space<vmem>>, vector<8x2176xf32>
    tpu.vector_store %arg4[%c0_5, %c0_6], %6 {strides = array<i32>} : memref<8x2176xf32, #tpu.memory_space<vmem>>, vector<8x2176xf32>,
    return
  }
  func.func @transform_0(%arg0: i32) -> (i32, i32) {
    %c0_i32 = arith.constant 0 : i32
    %c0_i32_0 = arith.constant 0 : i32
    return %arg0, %c0_i32 : i32, i32
  }
  func.func @transform_1(%arg0: i32) -> (i32, i32) {
    %c0_i32 = arith.constant 0 : i32
    %c0_i32_0 = arith.constant 0 : i32
    %c0_i32_1 = arith.constant 0 : i32
    return %c0_i32, %c0_i32_0 : i32, i32
  }
  func.func @transform_2(%arg0: i32) -> (i32, i32) {
    %c0_i32 = arith.constant 0 : i32
    %c0_i32_0 = arith.constant 0 : i32
    %c0_i32_1 = arith.constant 0 : i32
    return %c0_i32, %c0_i32_0 : i32, i32
  }
  func.func @transform_3(%arg0: i32) -> (i32, i32) {
    %c0_i32 = arith.constant 0 : i32
    %c0_i32_0 = arith.constant 0 : i32
    return %arg0, %c0_i32 : i32, i32
  }
}

</mosaic_0001>

<llo_original>
// kernel: tpu_custom_call.1
$region0: #{tpu_custom_call.1}
  #allocation0 [shape = 'u32[]', space=smem, size = 0x4, offset = 0x4, fixed_abs, tag = 'smem constant byte address 0x4 - core index']
  #allocation1 [shape = 'u32[144,128]{1,0:T(1,128)}', space=vmem, size = 0x12000, scoped, tag = 'internal scratch']
  %s0 = inlined_call_operand.hbm [shape: f32[32,2176], index: 0, kind: input, shape index: {}]
  %s1 = inlined_call_operand.hbm [shape: f32[1,2176], index: 1, kind: input, shape index: {}]
  %s2 = inlined_call_operand.hbm [shape: f32[1,2176], index: 2, kind: input, shape index: {}]
  %s3 = inlined_call_operand.hbm [shape: f32[32,2176], index: 3, kind: output, shape index: {}]
  %s4 = sld [smem:[#allocation0]]
  $region57: #{tpu_custom_call.1} parent=0
    _
  %s6 = ssub.s32 1, %s4
  %s7 = scalar_select 0, %s6, %s4
  $region1: #{tpu_custom_call.1} parent=0
    #allocation2 [shape = 'u8[139264]{0}', space=vmem, size = 0x22000, scoped, tag = 'input window, operand 0']
    #allocation3 [shape = 's32[2]{0}', space=sflag, size = 0x8, scoped, tag = 'scoped memory for tpu_custom_call.1']
    #allocation4 [shape = 's32[2]{0}', space=sflag, size = 0x8, scoped, tag = 'scoped memory for tpu_custom_call.1']
    #allocation5 [shape = 'u8[8704]{0}', space=vmem, size = 0x2400, scoped, tag = 'input window, operand 1, single buffered']
    #allocation6 [shape = 's32[1]{0}', space=sflag, size = 0x4, scoped, tag = 'scoped memory for tpu_custom_call.1']
    #allocation7 [shape = 'u8[8704]{0}', space=vmem, size = 0x2400, scoped, tag = 'input window, operand 2, single buffered']
    #allocation8 [shape = 'u8[139264]{0}', space=vmem, size = 0x22000, scoped, tag = 'output window, operand 0']
    %8 = vsyncpa [#allocation3], 0
    %s9 = scalar_lea.sflag [#allocation3], 1
    %10 = vsyncpa %s9, 0
    %11 = vsyncpa [#allocation6], 0
    %12 = vsyncpa [#allocation4], 0
    %s13 = scalar_lea.sflag [#allocation4], 1
    %14 = vsyncpa %s13, 0
    loop: start=0, step=1, limit=6
    $region2: #{tpu_custom_call.1} parent=1 // loop_pre_header
      _
    $region3: #{tpu_custom_call.1} parent=1 // loop_header
      %s16 = sphi 0, %s20
      %p17 = scmp.ge.s32.totalorder %s16, 6
      %s26 = sphi 0, %s28
      %s29 = sphi 0, %s26
      %s30 = sphi 0, %s29
      %s46 = sphi 0, %s30
      %s50 = sphi 0, %s50
      %s52 = sphi 0, %s50
      %s53 = sphi 0, %s52
      %s67 = sphi 0, %s53
      %s71 = sphi 0, %s71
      %s73 = sphi 0, %s71
      %s74 = sphi 0, %s73
      %s88 = sphi 0, %s74
      %s94 = sphi 0, %s96
      %s97 = sphi 0, %s94
      %s98 = sphi 0, %s97
      %s114 = sphi 0, %s98
    $region4: #{tpu_custom_call.1} parent=1 // loop_header_branch
      %19 = sbr.rel (%p17) target = $region8
    $region5: #{tpu_custom_call.1} parent=1 // loop_body
      %s21 = ssub.s32 %s16, 1
      %s22 = ssub.s32 %s16, 2
      %s23 = sadd.s32 %s16, 1
      %s24 = ssub.s32 %s16, %s23
      %p25 = scmp.eq.s32.totalorder %s24, 0
      %s27 = sadd.s32 %s26, 1
      %s28 = scalar_select %p25, %s26, %s27
      %p31 = pneg %p25
      %p32 = scmp.eq.s32.totalorder %s16, 3
      %p33 = por %p31, %p32
      %p34 = scmp.ne.s32.totalorder %s26, %s29
      %p35 = scmp.eq.s32.totalorder %s16, 0
      %p36 = por %p34, %p35
      %p37 = scmp.ne.s32.totalorder %s26, %s29
      %p38 = scmp.eq.s32.totalorder %s21, 3
      %p39 = por %p37, %p38
      %p40 = scmp.ne.s32.totalorder %s29, %s30
      %p41 = scmp.eq.s32.totalorder %s21, 0
      %p42 = por %p40, %p41
      %p43 = scmp.ne.s32.totalorder %s29, %s30
      %p44 = scmp.eq.s32.totalorder %s22, 3
      %p45 = por %p43, %p44
      %p47 = scmp.ne.s32.totalorder %s30, %s46
      %p48 = scmp.eq.s32.totalorder %s22, 0
      %p49 = por %p47, %p48
      %s51 = sadd.s32 %s50, 1
      %p54 = scmp.eq.s32.totalorder %s16, 3
      %p55 = scmp.ne.s32.totalorder %s50, %s52
      %p56 = scmp.eq.s32.totalorder %s16, 0
      %p57 = por %p55, %p56
      %p58 = scmp.ne.s32.totalorder %s50, %s52
      %p59 = scmp.eq.s32.totalorder %s21, 3
      %p60 = por %p58, %p59
      %p61 = scmp.ne.s32.totalorder %s52, %s53
      %p62 = scmp.eq.s32.totalorder %s21, 0
      %p63 = por %p61, %p62
      %p64 = scmp.ne.s32.totalorder %s52, %s53
      %p65 = scmp.eq.s32.totalorder %s22, 3
      %p66 = por %p64, %p65
      %p68 = scmp.ne.s32.totalorder %s53, %s67
      %p69 = scmp.eq.s32.totalorder %s22, 0
      %p70 = por %p68, %p69
      %s72 = sadd.s32 %s71, 1
      %p75 = scmp.eq.s32.totalorder %s16, 3
      %p76 = scmp.ne.s32.totalorder %s71, %s73
      %p77 = scmp.eq.s32.totalorder %s16, 0
      %p78 = por %p76, %p77
      %p79 = scmp.ne.s32.totalorder %s71, %s73
      %p80 = scmp.eq.s32.totalorder %s21, 3
      %p81 = por %p79, %p80
      %p82 = scmp.ne.s32.totalorder %s73, %s74
      %p83 = scmp.eq.s32.totalorder %s21, 0
      %p84 = por %p82, %p83
      %p85 = scmp.ne.s32.totalorder %s73, %s74
      %p86 = scmp.eq.s32.totalorder %s22, 3
      %p87 = por %p85, %p86
      %p89 = scmp.ne.s32.totalorder %s74, %s88
      %p90 = scmp.eq.s32.totalorder %s22, 0
      %p91 = por %p89, %p90
      %s92 = ssub.s32 %s16, %s23
      %p93 = scmp.eq.s32.totalorder %s92, 0
      %s95 = sadd.s32 %s94, 1
      %s96 = scalar_select %p93, %s94, %s95
      %p99 = pneg %p93
      %p100 = scmp.eq.s32.totalorder %s16, 3
      %p101 = por %p99, %p100
      %p102 = scmp.ne.s32.totalorder %s94, %s97
      %p103 = scmp.eq.s32.totalorder %s16, 0
      %p104 = por %p102, %p103
      %p105 = scmp.ne.s32.totalorder %s94, %s97
      %p106 = scmp.eq.s32.totalorder %s21, 3
      %p107 = por %p105, %p106
      %p108 = scmp.ne.s32.totalorder %s97, %s98
      %p109 = scmp.eq.s32.totalorder %s21, 0
      %p110 = por %p108, %p109
      %p111 = scmp.ne.s32.totalorder %s97, %s98
      %p112 = scmp.eq.s32.totalorder %s22, 3
      %p113 = por %p111, %p112
      %p115 = scmp.ne.s32.totalorder %s98, %s114
      %p116 = scmp.eq.s32.totalorder %s22, 0
      %p117 = por %p115, %p116
      %p118 = scmp.le.s32.totalorder 1, %s16
      %p119 = scmp.lt.s32.totalorder %s16, 5
      %p120 = pnand %p118, %p119
      %p121 = pneg %p120
      // Predicated region
      $region9: #{tpu_custom_call.1} parent=5 // pred_check
        _
      $region10: #{tpu_custom_call.1} parent=5 // pred_check_branch
        %123 = sbr.rel (%p120) target = $region12
      $region11: #{tpu_custom_call.1} parent=5 // pred_region
        %s124 = ssub.s32 %s16, 1
        // Predicated region
        $region13: #{tpu_custom_call.1} parent=11 // pred_check
          %p125 = pneg %p63
        $region14: #{tpu_custom_call.1} parent=11 // pred_check_branch
          %127 = sbr.rel (%p125) target = $region16
        $region15: #{tpu_custom_call.1} parent=11 // pred_region
          %s129 = ssub.s32 272, 272
          %130 = vsyncadd [#allocation6], %s129
          %s132 = sshll.u32 [#allocation5], 4
          %s133 = int_to_ptr.vmem [resolvable:$true] %s132
          %135 = dma.hbm_to_vmem [thread:$0]  %s1, 272, %s133, [#allocation6]
        $region16: #{tpu_custom_call.1} parent=11 // pred_fallthru
          _
        // Predicated region
        $region17: #{tpu_custom_call.1} parent=11 // pred_check
          %p136 = pneg %p84
        $region18: #{tpu_custom_call.1} parent=11 // pred_check_branch
          %138 = sbr.rel (%p136) target = $region20
        $region19: #{tpu_custom_call.1} parent=11 // pred_region
          %s140 = ssub.s32 272, 272
          %141 = vsyncadd [#allocation6], %s140
          %s143 = sshll.u32 [#allocation7], 4
          %s144 = int_to_ptr.vmem [resolvable:$true] %s143
          %146 = dma.hbm_to_vmem [thread:$0]  %s2, 272, %s144, [#allocation6]
        $region20: #{tpu_custom_call.1} parent=11 // pred_fallthru
          _
      $region12: #{tpu_custom_call.1} parent=5 // pred_fallthru
        _
      %p147 = scmp.lt.s32.totalorder %s16, 4
      // Predicated region
      $region21: #{tpu_custom_call.1} parent=5 // pred_check
        %p148 = pneg %p147
      $region22: #{tpu_custom_call.1} parent=5 // pred_check_branch
        %150 = sbr.rel (%p148) target = $region24
      $region23: #{tpu_custom_call.1} parent=5 // pred_region
        // Predicated region
        $region25: #{tpu_custom_call.1} parent=23 // pred_check
          %p151 = pneg %p36
        $region26: #{tpu_custom_call.1} parent=23 // pred_check_branch
          %153 = sbr.rel (%p151) target = $region28
        $region27: #{tpu_custom_call.1} parent=23 // pred_region
          %s154 = sand.u32 %s26, 1
          %s155 = scalar_lea.sflag [#allocation3], %s154
          %s156 = sand.u32 %s26, 1
          %s157 = smul.addr %s156, 136
          %s158 = scalar_lea.vmem [#allocation2], %s157
          %s160 = ssub.s32 2176, 2176
          %161 = vsyncadd %s155, %s160
          %s162 = smul.addr %s16, 17
          %s163 = smul.addr %s162, 128
          %s164 = scalar_lea.hbm %s0, %s163
          %s166 = sshll.u32 %s158, 4
          %s167 = int_to_ptr.vmem [resolvable:$true] %s166
          %169 = dma.hbm_to_vmem [thread:$0]  %s164, 2176, %s167, %s155
        $region28: #{tpu_custom_call.1} parent=23 // pred_fallthru
          _
      $region24: #{tpu_custom_call.1} parent=5 // pred_fallthru
        _
      %p170 = scmp.le.s32.totalorder 1, %s16
      %p171 = scmp.lt.s32.totalorder %s16, 5
      %p172 = pnand %p170, %p171
      %p173 = pneg %p172
      // Predicated region
      $region29: #{tpu_custom_call.1} parent=5 // pred_check
        _
      $region30: #{tpu_custom_call.1} parent=5 // pred_check_branch
        %175 = sbr.rel (%p172) target = $region32
      $region31: #{tpu_custom_call.1} parent=5 // pred_region
        %s176 = ssub.s32 %s16, 1
        %s177 = sand.u32 %s29, 1
        %s178 = scalar_lea.sflag [#allocation3], %s177
        %s179 = sand.u32 %s29, 1
        %s180 = smul.addr %s179, 136
        %s181 = scalar_lea.vmem [#allocation2], %s180
        // Predicated region
        $region33: #{tpu_custom_call.1} parent=31 // pred_check
          %p182 = pneg %p42
        $region34: #{tpu_custom_call.1} parent=31 // pred_check_branch
          %184 = sbr.rel (%p182) target = $region36
        $region35: #{tpu_custom_call.1} parent=31 // pred_region
          %185 = dma.done %s178, 2176
        $region36: #{tpu_custom_call.1} parent=31 // pred_fallthru
          _
        // Predicated region
        $region37: #{tpu_custom_call.1} parent=31 // pred_check
          %p186 = pneg %p63
        $region38: #{tpu_custom_call.1} parent=31 // pred_check_branch
          %188 = sbr.rel (%p186) target = $region40
        $region39: #{tpu_custom_call.1} parent=31 // pred_region
          %189 = dma.done [#allocation6], 272
        $region40: #{tpu_custom_call.1} parent=31 // pred_fallthru
          _
        // Predicated region
        $region41: #{tpu_custom_call.1} parent=31 // pred_check
          %p190 = pneg %p84
        $region42: #{tpu_custom_call.1} parent=31 // pred_check_branch
          %192 = sbr.rel (%p190) target = $region44
        $region43: #{tpu_custom_call.1} parent=31 // pred_region
          %193 = dma.done [#allocation6], 272
        $region44: #{tpu_custom_call.1} parent=31 // pred_fallthru
          _
        %s194 = sand.u32 %s29, 1
        %s195 = scalar_lea.sflag [#allocation3], %s194
        %s196 = sand.u32 %s29, 1
        %s197 = smul.addr %s196, 136
        %s198 = scalar_lea.vmem [#allocation2], %s197
        %p199 = pneg %p42
        %p200 = pneg %p39
        %p201 = pneg %p63
        %p202 = pneg %p60
        %p203 = pneg %p84
        %p204 = pneg %p81
        %p205 = pneg %p110
        %p206 = pneg %p107
        %s207 = sand.u32 %s97, 1
        %s208 = scalar_lea.sflag [#allocation4], %s207
        %s209 = sand.u32 %s97, 1
        %s210 = smul.addr %s209, 136
        %s211 = scalar_lea.vmem [#allocation8], %s210
        %v212 = vld [vmem:[%s181] sm:$0xff]
        %v213 = vld [vmem:[%s181 + $0x8] sm:$0xff]
        %v214 = vld [vmem:[%s181 + $0x10] sm:$0xff]
        %v215 = vld [vmem:[%s181 + $0x18] sm:$0xff]
        %v216 = vld [vmem:[%s181 + $0x20] sm:$0xff]
        %v217 = vld [vmem:[%s181 + $0x28] sm:$0xff]
        %v218 = vld [vmem:[%s181 + $0x30] sm:$0xff]
        %v219 = vld [vmem:[%s181 + $0x38] sm:$0xff]
        %v220 = vld [vmem:[%s181 + $0x40] sm:$0xff]
        %v221 = vld [vmem:[%s181 + $0x48] sm:$0xff]
        %v222 = vld [vmem:[%s181 + $0x50] sm:$0xff]
        %v223 = vld [vmem:[%s181 + $0x58] sm:$0xff]
        %v224 = vld [vmem:[%s181 + $0x60] sm:$0xff]
        %v225 = vld [vmem:[%s181 + $0x68] sm:$0xff]
        %v226 = vld [vmem:[%s181 + $0x70] sm:$0xff]
        %v227 = vld [vmem:[%s181 + $0x78] sm:$0xff]
        %v228 = vld [vmem:[%s181 + $0x80] sm:$0xff]
        %v229 = vld [vmem:[#allocation5] sm:$0xff]
        %v230 = vld [vmem:[#allocation5 + $0x8] sm:$0xff]
        %v231 = vld [vmem:[#allocation5 + $0x10] sm:$0x1]
        %v235 = vlaneseq
        %v236 = vshrl.u32 %v235, 7
        %v237 = vsub.s32 0, %v236
        %v238 = vrot.slane %v229, %v237
        %v239 = vlaneseq
        %v240 = vshrl.u32 %v239, 7
        %v241 = vsub.s32 1, %v240
        %v242 = vrot.slane %v229, %v241
        %v243 = vlaneseq
        %v244 = vshrl.u32 %v243, 7
        %v245 = vsub.s32 2, %v244
        %v246 = vrot.slane %v229, %v245
        %v247 = vlaneseq
        %v248 = vshrl.u32 %v247, 7
        %v249 = vsub.s32 3, %v248
        %v250 = vrot.slane %v229, %v249
        %v251 = vlaneseq
        %v252 = vshrl.u32 %v251, 7
        %v253 = vsub.s32 4, %v252
        %v254 = vrot.slane %v229, %v253
        %v255 = vlaneseq
        %v256 = vshrl.u32 %v255, 7
        %v257 = vsub.s32 5, %v256
        %v258 = vrot.slane %v229, %v257
        %v259 = vlaneseq
        %v260 = vshrl.u32 %v259, 7
        %v261 = vsub.s32 6, %v260
        %v262 = vrot.slane %v229, %v261
        %v263 = vlaneseq
        %v264 = vshrl.u32 %v263, 7
        %v265 = vsub.s32 7, %v264
        %v266 = vrot.slane %v229, %v265
        %v267 = vlaneseq
        %v268 = vshrl.u32 %v267, 7
        %v269 = vsub.s32 0, %v268
        %v270 = vrot.slane %v230, %v269
        %v271 = vlaneseq
        %v272 = vshrl.u32 %v271, 7
        %v273 = vsub.s32 1, %v272
        %v274 = vrot.slane %v230, %v273
        %v275 = vlaneseq
        %v276 = vshrl.u32 %v275, 7
        %v277 = vsub.s32 2, %v276
        %v278 = vrot.slane %v230, %v277
        %v279 = vlaneseq
        %v280 = vshrl.u32 %v279, 7
        %v281 = vsub.s32 3, %v280
        %v282 = vrot.slane %v230, %v281
        %v283 = vlaneseq
        %v284 = vshrl.u32 %v283, 7
        %v285 = vsub.s32 4, %v284
        %v286 = vrot.slane %v230, %v285
        %v287 = vlaneseq
        %v288 = vshrl.u32 %v287, 7
        %v289 = vsub.s32 5, %v288
        %v290 = vrot.slane %v230, %v289
        %v291 = vlaneseq
        %v292 = vshrl.u32 %v291, 7
        %v293 = vsub.s32 6, %v292
        %v294 = vrot.slane %v230, %v293
        %v295 = vlaneseq
        %v296 = vshrl.u32 %v295, 7
        %v297 = vsub.s32 7, %v296
        %v298 = vrot.slane %v230, %v297
        %v299 = vlaneseq
        %v300 = vshrl.u32 %v299, 7
        %v301 = vsub.s32 0, %v300
        %v302 = vrot.slane %v231, %v301
        %v320 = vmul.f32 %v212, %v238
        %v321 = vmul.f32 %v213, %v242
        %v322 = vmul.f32 %v214, %v246
        %v323 = vmul.f32 %v215, %v250
        %v324 = vmul.f32 %v216, %v254
        %v325 = vmul.f32 %v217, %v258
        %v326 = vmul.f32 %v218, %v262
        %v327 = vmul.f32 %v219, %v266
        %v328 = vmul.f32 %v220, %v270
        %v329 = vmul.f32 %v221, %v274
        %v330 = vmul.f32 %v222, %v278
        %v331 = vmul.f32 %v223, %v282
        %v332 = vmul.f32 %v224, %v286
        %v333 = vmul.f32 %v225, %v290
        %v334 = vmul.f32 %v226, %v294
        %v335 = vmul.f32 %v227, %v298
        %v336 = vmul.f32 %v228, %v302
        %v337 = vld [vmem:[#allocation7] sm:$0xff]
        %v338 = vld [vmem:[#allocation7 + $0x8] sm:$0xff]
        %v339 = vld [vmem:[#allocation7 + $0x10] sm:$0x1]
        %v343 = vlaneseq
        %v344 = vshrl.u32 %v343, 7
        %v345 = vsub.s32 0, %v344
        %v346 = vrot.slane %v337, %v345
        %v347 = vlaneseq
        %v348 = vshrl.u32 %v347, 7
        %v349 = vsub.s32 1, %v348
        %v350 = vrot.slane %v337, %v349
        %v351 = vlaneseq
        %v352 = vshrl.u32 %v351, 7
        %v353 = vsub.s32 2, %v352
        %v354 = vrot.slane %v337, %v353
        %v355 = vlaneseq
        %v356 = vshrl.u32 %v355, 7
        %v357 = vsub.s32 3, %v356
        %v358 = vrot.slane %v337, %v357
        %v359 = vlaneseq
        %v360 = vshrl.u32 %v359, 7
        %v361 = vsub.s32 4, %v360
        %v362 = vrot.slane %v337, %v361
        %v363 = vlaneseq
        %v364 = vshrl.u32 %v363, 7
        %v365 = vsub.s32 5, %v364
        %v366 = vrot.slane %v337, %v365
        %v367 = vlaneseq
        %v368 = vshrl.u32 %v367, 7
        %v369 = vsub.s32 6, %v368
        %v370 = vrot.slane %v337, %v369
        %v371 = vlaneseq
        %v372 = vshrl.u32 %v371, 7
        %v373 = vsub.s32 7, %v372
        %v374 = vrot.slane %v337, %v373
        %v375 = vlaneseq
        %v376 = vshrl.u32 %v375, 7
        %v377 = vsub.s32 0, %v376
        %v378 = vrot.slane %v338, %v377
        %v379 = vlaneseq
        %v380 = vshrl.u32 %v379, 7
        %v381 = vsub.s32 1, %v380
        %v382 = vrot.slane %v338, %v381
        %v383 = vlaneseq
        %v384 = vshrl.u32 %v383, 7
        %v385 = vsub.s32 2, %v384
        %v386 = vrot.slane %v338, %v385
        %v387 = vlaneseq
        %v388 = vshrl.u32 %v387, 7
        %v389 = vsub.s32 3, %v388
        %v390 = vrot.slane %v338, %v389
        %v391 = vlaneseq
        %v392 = vshrl.u32 %v391, 7
        %v393 = vsub.s32 4, %v392
        %v394 = vrot.slane %v338, %v393
        %v395 = vlaneseq
        %v396 = vshrl.u32 %v395, 7
        %v397 = vsub.s32 5, %v396
        %v398 = vrot.slane %v338, %v397
        %v399 = vlaneseq
        %v400 = vshrl.u32 %v399, 7
        %v401 = vsub.s32 6, %v400
        %v402 = vrot.slane %v338, %v401
        %v403 = vlaneseq
        %v404 = vshrl.u32 %v403, 7
        %v405 = vsub.s32 7, %v404
        %v406 = vrot.slane %v338, %v405
        %v407 = vlaneseq
        %v408 = vshrl.u32 %v407, 7
        %v409 = vsub.s32 0, %v408
        %v410 = vrot.slane %v339, %v409
        %v428 = vadd.f32 %v320, %v346
        %v429 = vadd.f32 %v321, %v350
        %v430 = vadd.f32 %v322, %v354
        %v431 = vadd.f32 %v323, %v358
        %v432 = vadd.f32 %v324, %v362
        %v433 = vadd.f32 %v325, %v366
        %v434 = vadd.f32 %v326, %v370
        %v435 = vadd.f32 %v327, %v374
        %v436 = vadd.f32 %v328, %v378
        %v437 = vadd.f32 %v329, %v382
        %v438 = vadd.f32 %v330, %v386
        %v439 = vadd.f32 %v331, %v390
        %v440 = vadd.f32 %v332, %v394
        %v441 = vadd.f32 %v333, %v398
        %v442 = vadd.f32 %v334, %v402
        %v443 = vadd.f32 %v335, %v406
        %v444 = vadd.f32 %v336, %v410
        %445 = vst [vmem:[%s211] sm:$0xff] %v428
        %446 = vst [vmem:[%s211 + $0x8] sm:$0xff] %v429
        %447 = vst [vmem:[%s211 + $0x10] sm:$0xff] %v430
        %448 = vst [vmem:[%s211 + $0x18] sm:$0xff] %v431
        %449 = vst [vmem:[%s211 + $0x20] sm:$0xff] %v432
        %450 = vst [vmem:[%s211 + $0x28] sm:$0xff] %v433
        %451 = vst [vmem:[%s211 + $0x30] sm:$0xff] %v434
        %452 = vst [vmem:[%s211 + $0x38] sm:$0xff] %v435
        %453 = vst [vmem:[%s211 + $0x40] sm:$0xff] %v436
        %454 = vst [vmem:[%s211 + $0x48] sm:$0xff] %v437
        %455 = vst [vmem:[%s211 + $0x50] sm:$0xff] %v438
        %456 = vst [vmem:[%s211 + $0x58] sm:$0xff] %v439
        %457 = vst [vmem:[%s211 + $0x60] sm:$0xff] %v440
        %458 = vst [vmem:[%s211 + $0x68] sm:$0xff] %v441
        %459 = vst [vmem:[%s211 + $0x70] sm:$0xff] %v442
        %460 = vst [vmem:[%s211 + $0x78] sm:$0xff] %v443
        %461 = vst [vmem:[%s211 + $0x80] sm:$0xff] %v444
        %s462 = sand.u32 %s97, 1
        %s463 = scalar_lea.sflag [#allocation4], %s462
        %s464 = sand.u32 %s97, 1
        %s465 = smul.addr %s464, 136
        %s466 = scalar_lea.vmem [#allocation8], %s465
        // Predicated region
        $region45: #{tpu_custom_call.1} parent=31 // pred_check
          %p467 = pneg %p107
        $region46: #{tpu_custom_call.1} parent=31 // pred_check_branch
          %469 = sbr.rel (%p467) target = $region48
        $region47: #{tpu_custom_call.1} parent=31 // pred_region
          %s471 = ssub.s32 2176, 2176
          %472 = vsyncadd %s463, %s471
          %s473 = smul.addr %s21, 17
          %s474 = smul.addr %s473, 128
          %s475 = scalar_lea.hbm %s3, %s474
          %s477 = sshll.u32 %s466, 4
          %s478 = int_to_ptr.vmem [resolvable:$true] %s477
          %480 = dma.vmem_to_hbm [thread:$0]  %s478, 2176, %s475, %s463
        $region48: #{tpu_custom_call.1} parent=31 // pred_fallthru
          _
      $region32: #{tpu_custom_call.1} parent=5 // pred_fallthru
        _
      %p481 = scmp.le.s32.totalorder 2, %s16
      // Predicated region
      $region49: #{tpu_custom_call.1} parent=5 // pred_check
        %p482 = pneg %p481
      $region50: #{tpu_custom_call.1} parent=5 // pred_check_branch
        %484 = sbr.rel (%p482) target = $region52
      $region51: #{tpu_custom_call.1} parent=5 // pred_region
        %s485 = ssub.s32 %s16, 2
        // Predicated region
        $region53: #{tpu_custom_call.1} parent=51 // pred_check
          %p486 = pneg %p113
        $region54: #{tpu_custom_call.1} parent=51 // pred_check_branch
          %488 = sbr.rel (%p486) target = $region56
        $region55: #{tpu_custom_call.1} parent=51 // pred_region
          %s489 = sand.u32 %s98, 1
          %s490 = scalar_lea.sflag [#allocation4], %s489
          %s491 = sand.u32 %s98, 1
          %s492 = smul.addr %s491, 136
          %s493 = scalar_lea.vmem [#allocation8], %s492
          %494 = dma.done %s490, 2176
        $region56: #{tpu_custom_call.1} parent=51 // pred_fallthru
          _
      $region52: #{tpu_custom_call.1} parent=5 // pred_fallthru
        _
    $region6: #{tpu_custom_call.1} parent=1 // loop_footer
      %s20 = sadd.s32 1, %s16
    $region7: #{tpu_custom_call.1} parent=1 // loop_footer_branch
      %15 = sbr.rel target = $region3
    $region8: #{tpu_custom_call.1} parent=1 // loop_exit
      _
    %495 = vsyncpa [#allocation3], 1
    %s496 = scalar_lea.sflag [#allocation3], 1
    %497 = vsyncpa %s496, 1
    %498 = vsyncpa [#allocation6], 1
    %499 = vsyncpa [#allocation4], 1
    %s500 = scalar_lea.sflag [#allocation4], 1
    %501 = vsyncpa %s500, 1

</llo_original>
